<compile_context>
chip_gen: v7x
topology: tpu7x:2x2x1
jax: 0.10.0
libtpu: 0.0.40
codegen_flags: <defaults>
</compile_context>

<pallas_src>
import jax
import jax.numpy as jnp
from jax.experimental import pallas as pl
from jax.experimental.pallas import tpu as pltpu

KH = KW = 3  # fixed 3x3 kernel from the module definition


def _make_conv_kernel(NB, OH, OW, CIN, COUT):
    """Per-grid-step kernel: NB images, 3 banded MXU matmuls per image."""
    OWC = OW * COUT

    def kernel(x_ref, w_ref, b_ref, o_ref):
        # x_ref: (NB, H, W*CIN)        channels-last image slab(s)
        # w_ref: (KH, W*CIN, OW*COUT)  per-kh block-banded weights
        # b_ref: (1, OW*COUT)          bias tiled across the OW output blocks
        # o_ref: (NB, OH, OW*COUT)     lane-dense output slab(s)
        # Single hoisted bias broadcast, folded into the accumulator init.
        bias = jnp.broadcast_to(b_ref[...].astype(jnp.float32), (OH, OWC))
        for n in range(NB):                       # static, tiny trip count
            acc = bias
            for kh in range(KH):
                # Full 48-lane row slab (sublane offset only): one
                # (OH, W*CIN) @ (W*CIN, OW*COUT) MXU matmul per kh tap.
                xs = x_ref[n, kh:kh + OH, :]
                acc = acc + jnp.dot(xs, w_ref[kh],
                                    preferred_element_type=jnp.float32)
            o_ref[n] = acc.astype(o_ref.dtype)

    return kernel


def conv2d_3x3(x_nchw, w_oihw, b, *, compute_dtype=jnp.float32):
    """VALID 3x3 conv matching nn.Conv2d(Cin, Cout, kernel_size=3) forward."""
    N, CIN, H, W = x_nchw.shape
    COUT = w_oihw.shape[0]
    OH, OW = H - KH + 1, W - KW + 1

    # Batch blocking: NB images per grid step. Keep >= 2 grid steps so both
    # v7x TensorCores get work; on single-TC v5e/v6e this still amortizes
    # per-step overhead across the batch.
    NB = N // 2 if (N >= 2 and N % 2 == 0) else 1
    n_steps = N // NB

    # ---- wrapper-side layout prep (pure glue; weight prep is one-time) ----
    # Input: NCHW -> (N, H, W*Cin) channels-last slab (contiguous reshape).
    x2 = jnp.transpose(x_nchw, (0, 2, 3, 1)).reshape(N, H, W * CIN)
    x2 = x2.astype(compute_dtype)

    # Weights: OIHW -> per-kh block-BANDED (W*Cin, OW*Cout) matrices.
    #   W_kh[w*CIN + i, q*COUT + o] = w[o, i, kh, w - q]  iff 0 <= w - q < KW.
    w_taps = jnp.transpose(w_oihw, (2, 3, 1, 0))              # (KH, KW, CIN, COUT)
    band = (jnp.arange(W)[None, :, None] - jnp.arange(OW)[None, None, :]
            == jnp.arange(KW)[:, None, None]).astype(w_taps.dtype)  # (KW, W, OW)
    w_band = jnp.einsum("kwq,hkio->hwiqo", band, w_taps)      # (KH, W, CIN, OW, COUT)
    w_band = w_band.reshape(KH, W * CIN, OW * COUT).astype(compute_dtype)

    # Bias tiled so column q*COUT + o carries b[o] (kept f32 for accumulation).
    b_tiled = jnp.tile(b, OW).reshape(1, OW * COUT).astype(jnp.float32)

    kernel = _make_conv_kernel(NB, OH, OW, CIN, COUT)

    out2 = pl.pallas_call(
        kernel,
        out_shape=jax.ShapeDtypeStruct((N, OH, OW * COUT), x_nchw.dtype),
        grid_spec=pltpu.PrefetchScalarGridSpec(
            num_scalar_prefetch=0,
            grid=(n_steps,),   # batch-blocked; "parallel" -> v7x's 2 TCs
            in_specs=[
                pl.BlockSpec((NB, H, W * CIN), lambda n: (n, 0, 0)),
                # small, fully resident weights / bias (constant index maps ->
                # DMA'd once; single-buffering only matters at scaled-up sizes)
                pl.BlockSpec((KH, W * CIN, OW * COUT), lambda n: (0, 0, 0)),
                pl.BlockSpec((1, OW * COUT), lambda n: (0, 0)),
            ],
            out_specs=pl.BlockSpec((NB, OH, OW * COUT), lambda n: (n, 0, 0)),
        ),
        compiler_params=pltpu.CompilerParams(
            dimension_semantics=("parallel",)),
    )(x2, w_band, b_tiled)

    # Back to PyTorch NCHW output convention.  TODO(synk): if the downstream
    # consumer accepts NHWC (or the raw (N, OH, OW*COUT) slab), drop this
    # transpose -- it re-reads/re-writes the whole output in a separate pass.
    out_nhwc = out2.reshape(N, OH, OW, COUT)
    return jnp.transpose(out_nhwc, (0, 3, 1, 2))


if __name__ == "__main__":
    key = jax.random.PRNGKey(0)
    kx, kw_key, kb_key = jax.random.split(key, 3)

    # Small shapes consistent with the module: Conv2d(3 -> 64, k=3).
    N, CIN, H, W = 2, 3, 16, 16
    COUT = 64

    x = jax.random.normal(kx, (N, CIN, H, W), dtype=jnp.float32)

    # Deterministic parameter init (PyTorch-style uniform(-1/sqrt(fan_in), +)).
    fan_in = CIN * KH * KW
    bound = 1.0 / (fan_in ** 0.5)
    w = jax.random.uniform(kw_key, (COUT, CIN, KH, KW),
                           minval=-bound, maxval=bound, dtype=jnp.float32)
    b = jax.random.uniform(kb_key, (COUT,),
                           minval=-bound, maxval=bound, dtype=jnp.float32)

    out = conv2d_3x3(x, w, b)
    out = jax.block_until_ready(out)

    # Sanity check against XLA's conv (same semantics as nn.Conv2d forward).
    ref = jax.lax.conv_general_dilated(
        x, w, window_strides=(1, 1), padding="VALID",
        dimension_numbers=("NCHW", "OIHW", "NCHW"))
    ref = ref + b.reshape(1, COUT, 1, 1)

    assert out.shape == (N, COUT, H - KH + 1, W - KW + 1), out.shape
    assert jnp.allclose(out, ref, rtol=1e-3, atol=1e-3), "mismatch vs reference conv"

    print("KERNEL_OK")
</pallas_src>

<mosaic_0001>
module attributes {stable_mosaic.version = 11 : i64} {
  func.func @kernel(%arg0: i32, %arg1: memref<1x16x48xf32, #tpu.memory_space<vmem>>, %arg2: memref<3x48x896xf32, #tpu.memory_space<vmem>>, %arg3: memref<1x896xf32, #tpu.memory_space<vmem>>, %arg4: memref<1x14x896xf32, #tpu.memory_space<vmem>>) attributes {dimension_semantics = [#tpu.dimension_semantics<parallel>], iteration_bounds = array<i64: 2>, scalar_prefetch = 0 : i64, scratch_operands = 0 : i64, tpu.core_type = #tpu.core_type<tc>, window_params = [{transform_indices = @transform_0, window_bounds = array<i64: 1, 16, 48>}, {pipeline_mode = #tpu.pipeline_mode<synchronous>, transform_indices = @transform_1, window_bounds = array<i64: 3, 48, 896>}, {pipeline_mode = #tpu.pipeline_mode<synchronous>, transform_indices = @transform_2, window_bounds = array<i64: 1, 896>}, {transform_indices = @transform_3, window_bounds = array<i64: 1, 14, 896>}]} {
    %c0 = arith.constant 0 : index
    %c0_0 = arith.constant 0 : index
    %0 = vector.load %arg3[%c0, %c0_0] : memref<1x896xf32, #tpu.memory_space<vmem>>, vector<1x896xf32>
    %1 = vector.shape_cast %0 : vector<1x896xf32> to vector<1x896xf32>
    %2 = vector.broadcast %1 : vector<1x896xf32> to vector<14x896xf32>
    %c0_1 = arith.constant 0 : index
    %c0_2 = arith.constant 0 : index
    %c0_3 = arith.constant 0 : index
    %3 = vector.load %arg1[%c0_1, %c0_2, %c0_3] : memref<1x16x48xf32, #tpu.memory_space<vmem>>, vector<1x14x48xf32>
    %4 = vector.shape_cast %3 : vector<1x14x48xf32> to vector<14x48xf32>
    %c0_4 = arith.constant 0 : index
    %c0_5 = arith.constant 0 : index
    %c0_6 = arith.constant 0 : index
    %5 = vector.load %arg2[%c0_4, %c0_5, %c0_6] : memref<3x48x896xf32, #tpu.memory_space<vmem>>, vector<1x48x896xf32>
    %6 = vector.shape_cast %5 : vector<1x48x896xf32> to vector<48x896xf32>
    %cst = arith.constant dense<0.000000e+00> : vector<14x896xf32>
    %7 = tpu.matmul %4, %6, %cst {dimension_numbers = #tpu.dot_dimension_numbers<[1], [0], [0], [1], [0, 0, 1, 1], [], []>} : vector<14x48xf32>, vector<48x896xf32>, vector<14x896xf32> -> vector<14x896xf32>
    %8 = arith.addf %2, %7 : vector<14x896xf32>
    %c0_7 = arith.constant 0 : index
    %c1 = arith.constant 1 : index
    %c0_8 = arith.constant 0 : index
    %9 = vector.load %arg1[%c0_7, %c1, %c0_8] : memref<1x16x48xf32, #tpu.memory_space<vmem>>, vector<1x14x48xf32>
    %10 = vector.shape_cast %9 : vector<1x14x48xf32> to vector<14x48xf32>
    %c1_9 = arith.constant 1 : index
    %c0_10 = arith.constant 0 : index
    %c0_11 = arith.constant 0 : index
    %11 = vector.load %arg2[%c1_9, %c0_10, %c0_11] : memref<3x48x896xf32, #tpu.memory_space<vmem>>, vector<1x48x896xf32>
    %12 = vector.shape_cast %11 : vector<1x48x896xf32> to vector<48x896xf32>
    %cst_12 = arith.constant dense<0.000000e+00> : vector<14x896xf32>
    %13 = tpu.matmul %10, %12, %cst_12 {dimension_numbers = #tpu.dot_dimension_numbers<[1], [0], [0], [1], [0, 0, 1, 1], [], []>} : vector<14x48xf32>, vector<48x896xf32>, vector<14x896xf32> -> vector<14x896xf32>
    %14 = arith.addf %8, %13 : vector<14x896xf32>
    %c0_13 = arith.constant 0 : index
    %c2 = arith.constant 2 : index
    %c0_14 = arith.constant 0 : index
    %15 = vector.load %arg1[%c0_13, %c2, %c0_14] : memref<1x16x48xf32, #tpu.memory_space<vmem>>, vector<1x14x48xf32>
    %16 = vector.shape_cast %15 : vector<1x14x48xf32> to vector<14x48xf32>
    %c2_15 = arith.constant 2 : index
    %c0_16 = arith.constant 0 : index
    %c0_17 = arith.constant 0 : index
    %17 = vector.load %arg2[%c2_15, %c0_16, %c0_17] : memref<3x48x896xf32, #tpu.memory_space<vmem>>, vector<1x48x896xf32>
    %18 = vector.shape_cast %17 : vector<1x48x896xf32> to vector<48x896xf32>
    %cst_18 = arith.constant dense<0.000000e+00> : vector<14x896xf32>
    %19 = tpu.matmul %16, %18, %cst_18 {dimension_numbers = #tpu.dot_dimension_numbers<[1], [0], [0], [1], [0, 0, 1, 1], [], []>} : vector<14x48xf32>, vector<48x896xf32>, vector<14x896xf32> -> vector<14x896xf32>
    %20 = arith.addf %14, %19 : vector<14x896xf32>
    %c0_19 = arith.constant 0 : index
    %c0_20 = arith.constant 0 : index
    %c0_21 = arith.constant 0 : index
    %21 = vector.load %arg4[%c0_19, %c0_20, %c0_21] : memref<1x14x896xf32, #tpu.memory_space<vmem>>, vector<1x14x896xf32>
    %22 = vector.shape_cast %21 : vector<1x14x896xf32> to vector<14x896xf32>
    %23 = vector.shape_cast %20 : vector<14x896xf32> to vector<1x14x896xf32>
    tpu.vector_store %arg4[%c0_19, %c0_20, %c0_21], %23 {strides = array<i32>} : memref<1x14x896xf32, #tpu.memory_space<vmem>>, vector<1x14x896xf32>,
    return
  }
  func.func @transform_0(%arg0: i32) -> (i32, i32, i32) {
    %c0_i32 = arith.constant 0 : i32
    %c0_i32_0 = arith.constant 0 : i32
    %c0_i32_1 = arith.constant 0 : i32
    return %arg0, %c0_i32, %c0_i32_0 : i32, i32, i32
  }
  func.func @transform_1(%arg0: i32) -> (i32, i32, i32) {
    %c0_i32 = arith.constant 0 : i32
    %c0_i32_0 = arith.constant 0 : i32
    %c0_i32_1 = arith.constant 0 : i32
    %c0_i32_2 = arith.constant 0 : i32
    return %c0_i32, %c0_i32_0, %c0_i32_1 : i32, i32, i32
  }
  func.func @transform_2(%arg0: i32) -> (i32, i32) {
    %c0_i32 = arith.constant 0 : i32
    %c0_i32_0 = arith.constant 0 : i32
    %c0_i32_1 = arith.constant 0 : i32
    return %c0_i32, %c0_i32_0 : i32, i32
  }
  func.func @transform_3(%arg0: i32) -> (i32, i32, i32) {
    %c0_i32 = arith.constant 0 : i32
    %c0_i32_0 = arith.constant 0 : i32
    %c0_i32_1 = arith.constant 0 : i32
    return %arg0, %c0_i32, %c0_i32_0 : i32, i32, i32
  }
}

</mosaic_0001>

<llo_original>
// kernel: tpu_custom_call.1
$region0: #{tpu_custom_call.1}
  #allocation0 [shape = 'u32[]', space=smem, size = 0x4, offset = 0x4, fixed_abs, tag = 'smem constant byte address 0x4 - core index']
  #allocation1 [shape = 'u32[144,128]{1,0:T(1,128)}', space=vmem, size = 0x12000, scoped, tag = 'internal scratch']
  %s0 = inlined_call_operand.hbm [shape: f32[2,16,48], index: 0, kind: input, shape index: {}]
  %s1 = inlined_call_operand.hbm [shape: f32[3,48,896], index: 1, kind: input, shape index: {}]
  %s2 = inlined_call_operand.vmem [shape: f32[1,896], index: 2, kind: input, shape index: {}]
  %s3 = inlined_call_operand.vmem [shape: f32[2,14,896], index: 3, kind: output, shape index: {}]
  %s4 = sld [smem:[#allocation0]]
  $region53: #{tpu_custom_call.1} parent=0
    _
  %s6 = ssub.s32 1, %s4
  %s7 = scalar_select 0, %s6, %s4
  $region1: #{tpu_custom_call.1} parent=0
    #allocation2 [shape = 'u8[16384]{0}', space=vmem, size = 0x4000, scoped, tag = 'input window, operand 0']
    #allocation3 [shape = 's32[2]{0}', space=sflag, size = 0x8, scoped, tag = 'scoped memory for tpu_custom_call.1']
    #allocation4 [shape = 'u8[516096]{0}', space=vmem, size = 0x7e000, scoped, tag = 'input window, operand 1, single buffered']
    #allocation5 [shape = 's32[1]{0}', space=sflag, size = 0x4, scoped, tag = 'scoped memory for tpu_custom_call.1']
    %8 = vsyncpa [#allocation3], 0
    %s9 = scalar_lea.sflag [#allocation3], 1
    %10 = vsyncpa %s9, 0
    %11 = vsyncpa [#allocation5], 0
    loop: start=0, step=1, limit=4
    $region2: #{tpu_custom_call.1} parent=1 // loop_pre_header
      _
    $region3: #{tpu_custom_call.1} parent=1 // loop_header
      %s13 = sphi 0, %s17
      %p14 = scmp.ge.s32.totalorder %s13, 4
      %s23 = sphi 0, %s25
      %s26 = sphi 0, %s23
      %s27 = sphi 0, %s26
      %s43 = sphi 0, %s27
      %s47 = sphi 0, %s47
      %s49 = sphi 0, %s47
      %s50 = sphi 0, %s49
      %s64 = sphi 0, %s50
      %s68 = sphi 0, %s68
      %s70 = sphi 0, %s68
      %s71 = sphi 0, %s70
      %s85 = sphi 0, %s71
      %s91 = sphi 0, %s93
      %s94 = sphi 0, %s91
      %s95 = sphi 0, %s94
      %s111 = sphi 0, %s95
    $region4: #{tpu_custom_call.1} parent=1 // loop_header_branch
      %16 = sbr.rel (%p14) target = $region8
    $region5: #{tpu_custom_call.1} parent=1 // loop_body
      %s18 = ssub.s32 %s13, 1
      %s19 = ssub.s32 %s13, 2
      %s20 = sadd.s32 %s13, 1
      %s21 = ssub.s32 %s13, %s20
      %p22 = scmp.eq.s32.totalorder %s21, 0
      %s24 = sadd.s32 %s23, 1
      %s25 = scalar_select %p22, %s23, %s24
      %p28 = pneg %p22
      %p29 = scmp.eq.s32.totalorder %s13, 1
      %p30 = por %p28, %p29
      %p31 = scmp.ne.s32.totalorder %s23, %s26
      %p32 = scmp.eq.s32.totalorder %s13, 0
      %p33 = por %p31, %p32
      %p34 = scmp.ne.s32.totalorder %s23, %s26
      %p35 = scmp.eq.s32.totalorder %s18, 1
      %p36 = por %p34, %p35
      %p37 = scmp.ne.s32.totalorder %s26, %s27
      %p38 = scmp.eq.s32.totalorder %s18, 0
      %p39 = por %p37, %p38
      %p40 = scmp.ne.s32.totalorder %s26, %s27
      %p41 = scmp.eq.s32.totalorder %s19, 1
      %p42 = por %p40, %p41
      %p44 = scmp.ne.s32.totalorder %s27, %s43
      %p45 = scmp.eq.s32.totalorder %s19, 0
      %p46 = por %p44, %p45
      %s48 = sadd.s32 %s47, 1
      %p51 = scmp.eq.s32.totalorder %s13, 1
      %p52 = scmp.ne.s32.totalorder %s47, %s49
      %p53 = scmp.eq.s32.totalorder %s13, 0
      %p54 = por %p52, %p53
      %p55 = scmp.ne.s32.totalorder %s47, %s49
      %p56 = scmp.eq.s32.totalorder %s18, 1
      %p57 = por %p55, %p56
      %p58 = scmp.ne.s32.totalorder %s49, %s50
      %p59 = scmp.eq.s32.totalorder %s18, 0
      %p60 = por %p58, %p59
      %p61 = scmp.ne.s32.totalorder %s49, %s50
      %p62 = scmp.eq.s32.totalorder %s19, 1
      %p63 = por %p61, %p62
      %p65 = scmp.ne.s32.totalorder %s50, %s64
      %p66 = scmp.eq.s32.totalorder %s19, 0
      %p67 = por %p65, %p66
      %s69 = sadd.s32 %s68, 1
      %p72 = scmp.eq.s32.totalorder %s13, 1
      %p73 = scmp.ne.s32.totalorder %s68, %s70
      %p74 = scmp.eq.s32.totalorder %s13, 0
      %p75 = por %p73, %p74
      %p76 = scmp.ne.s32.totalorder %s68, %s70
      %p77 = scmp.eq.s32.totalorder %s18, 1
      %p78 = por %p76, %p77
      %p79 = scmp.ne.s32.totalorder %s70, %s71
      %p80 = scmp.eq.s32.totalorder %s18, 0
      %p81 = por %p79, %p80
      %p82 = scmp.ne.s32.totalorder %s70, %s71
      %p83 = scmp.eq.s32.totalorder %s19, 1
      %p84 = por %p82, %p83
      %p86 = scmp.ne.s32.totalorder %s71, %s85
      %p87 = scmp.eq.s32.totalorder %s19, 0
      %p88 = por %p86, %p87
      %s89 = ssub.s32 %s13, %s20
      %p90 = scmp.eq.s32.totalorder %s89, 0
      %s92 = sadd.s32 %s91, 1
      %s93 = scalar_select %p90, %s91, %s92
      %p96 = pneg %p90
      %p97 = scmp.eq.s32.totalorder %s13, 1
      %p98 = por %p96, %p97
      %p99 = scmp.ne.s32.totalorder %s91, %s94
      %p100 = scmp.eq.s32.totalorder %s13, 0
      %p101 = por %p99, %p100
      %p102 = scmp.ne.s32.totalorder %s91, %s94
      %p103 = scmp.eq.s32.totalorder %s18, 1
      %p104 = por %p102, %p103
      %p105 = scmp.ne.s32.totalorder %s94, %s95
      %p106 = scmp.eq.s32.totalorder %s18, 0
      %p107 = por %p105, %p106
      %p108 = scmp.ne.s32.totalorder %s94, %s95
      %p109 = scmp.eq.s32.totalorder %s19, 1
      %p110 = por %p108, %p109
      %p112 = scmp.ne.s32.totalorder %s95, %s111
      %p113 = scmp.eq.s32.totalorder %s19, 0
      %p114 = por %p112, %p113
      %p115 = scmp.le.s32.totalorder 1, %s13
      %p116 = scmp.lt.s32.totalorder %s13, 3
      %p117 = pnand %p115, %p116
      %p118 = pneg %p117
      // Predicated region
      $region9: #{tpu_custom_call.1} parent=5 // pred_check
        _
      $region10: #{tpu_custom_call.1} parent=5 // pred_check_branch
        %120 = sbr.rel (%p117) target = $region12
      $region11: #{tpu_custom_call.1} parent=5 // pred_region
        %s121 = ssub.s32 %s13, 1
        // Predicated region
        $region13: #{tpu_custom_call.1} parent=11 // pred_check
          %p122 = pneg %p60
        $region14: #{tpu_custom_call.1} parent=11 // pred_check_branch
          %124 = sbr.rel (%p122) target = $region16
        $region15: #{tpu_custom_call.1} parent=11 // pred_region
          %s126 = ssub.s32 16128, 16128
          %127 = vsyncadd [#allocation5], %s126
          %s128 = sshll.u32 [#allocation4], 4
          %s129 = int_to_ptr.vmem [resolvable:$true] %s128
          %134 = dma.hbm_to_vmem [thread:$0]  %s1, 16128, %s129, [#allocation5], 896, 896, 56
        $region16: #{tpu_custom_call.1} parent=11 // pred_fallthru
          _
        // Predicated region
        $region17: #{tpu_custom_call.1} parent=11 // pred_check
          %p135 = pneg %p81
        $region18: #{tpu_custom_call.1} parent=11 // pred_check_branch
          %137 = sbr.rel (%p135) target = $region20
        $region19: #{tpu_custom_call.1} parent=11 // pred_region
          _
        $region20: #{tpu_custom_call.1} parent=11 // pred_fallthru
          _
      $region12: #{tpu_custom_call.1} parent=5 // pred_fallthru
        _
      %p138 = scmp.lt.s32.totalorder %s13, 2
      // Predicated region
      $region21: #{tpu_custom_call.1} parent=5 // pred_check
        %p139 = pneg %p138
      $region22: #{tpu_custom_call.1} parent=5 // pred_check_branch
        %141 = sbr.rel (%p139) target = $region24
      $region23: #{tpu_custom_call.1} parent=5 // pred_region
        // Predicated region
        $region25: #{tpu_custom_call.1} parent=23 // pred_check
          %p142 = pneg %p33
        $region26: #{tpu_custom_call.1} parent=23 // pred_check_branch
          %144 = sbr.rel (%p142) target = $region28
        $region27: #{tpu_custom_call.1} parent=23 // pred_region
          %s145 = sand.u32 %s23, 1
          %s146 = scalar_lea.sflag [#allocation3], %s145
          %s147 = sand.u32 %s23, 1
          %s148 = smul.addr %s147, 16
          %s149 = scalar_lea.vmem [#allocation2], %s148
          %s151 = ssub.s32 256, 256
          %152 = vsyncadd %s146, %s151
          %s153 = smul.addr %s13, 2
          %s154 = smul.addr %s153, 128
          %s155 = scalar_lea.hbm %s0, %s154
          %s156 = sshll.u32 %s149, 4
          %s157 = int_to_ptr.vmem [resolvable:$true] %s156
          %162 = dma.hbm_to_vmem [thread:$0]  %s155, 256, %s157, %s146, 128, 128, 8
        $region28: #{tpu_custom_call.1} parent=23 // pred_fallthru
          _
      $region24: #{tpu_custom_call.1} parent=5 // pred_fallthru
        _
      %p163 = scmp.le.s32.totalorder 1, %s13
      %p164 = scmp.lt.s32.totalorder %s13, 3
      %p165 = pnand %p163, %p164
      %p166 = pneg %p165
      // Predicated region
      $region29: #{tpu_custom_call.1} parent=5 // pred_check
        _
      $region30: #{tpu_custom_call.1} parent=5 // pred_check_branch
        %168 = sbr.rel (%p165) target = $region32
      $region31: #{tpu_custom_call.1} parent=5 // pred_region
        %s169 = ssub.s32 %s13, 1
        %s170 = sand.u32 %s26, 1
        %s171 = scalar_lea.sflag [#allocation3], %s170
        %s172 = sand.u32 %s26, 1
        %s173 = smul.addr %s172, 16
        %s174 = scalar_lea.vmem [#allocation2], %s173
        // Predicated region
        $region33: #{tpu_custom_call.1} parent=31 // pred_check
          %p175 = pneg %p39
        $region34: #{tpu_custom_call.1} parent=31 // pred_check_branch
          %177 = sbr.rel (%p175) target = $region36
        $region35: #{tpu_custom_call.1} parent=31 // pred_region
          %178 = dma.done %s171, 256
        $region36: #{tpu_custom_call.1} parent=31 // pred_fallthru
          _
        // Predicated region
        $region37: #{tpu_custom_call.1} parent=31 // pred_check
          %p179 = pneg %p60
        $region38: #{tpu_custom_call.1} parent=31 // pred_check_branch
          %181 = sbr.rel (%p179) target = $region40
        $region39: #{tpu_custom_call.1} parent=31 // pred_region
          %182 = dma.done [#allocation5], 16128
        $region40: #{tpu_custom_call.1} parent=31 // pred_fallthru
          _
        %s183 = sand.u32 %s26, 1
        %s184 = scalar_lea.sflag [#allocation3], %s183
        %s185 = sand.u32 %s26, 1
        %s186 = smul.addr %s185, 16
        %s187 = scalar_lea.vmem [#allocation2], %s186
        %p188 = pneg %p39
        %p189 = pneg %p36
        %p190 = pneg %p60
        %p191 = pneg %p57
        %p192 = pneg %p81
        %p193 = pneg %p78
        %p194 = pneg %p107
        %p195 = pneg %p104
        %p196 = scmp.lt.s32.totalorder %s18, 1
        %s197 = scalar_select %p196, %s18, 1
        %s198 = smul.addr %s197, 14
        %s199 = smul.addr %s198, 8
        %s200 = scalar_lea.vmem %s3, %s199
        %p201 = scmp.lt.s32.totalorder %s18, 1
        %s202 = scalar_select %p201, %s18, 1
        %s203 = smul.addr %s202, 14
        %s204 = smul.addr %s203, 8
        %s205 = scalar_lea.vmem %s3, %s204
        %v206 = vld [vmem:[%s2] sm:$0xff]
        %v208 = vlaneseq
        %v209 = vshrl.u32 %v208, 7
        %v210 = vsub.s32 0, %v209
        %v211 = vrot.slane %v206, %v210
        %v212 = vlaneseq
        %v213 = vshrl.u32 %v212, 7
        %v214 = vsub.s32 1, %v213
        %v215 = vrot.slane %v206, %v214
        %v216 = vlaneseq
        %v217 = vshrl.u32 %v216, 7
        %v218 = vsub.s32 2, %v217
        %v219 = vrot.slane %v206, %v218
        %v220 = vlaneseq
        %v221 = vshrl.u32 %v220, 7
        %v222 = vsub.s32 3, %v221
        %v223 = vrot.slane %v206, %v222
        %v224 = vlaneseq
        %v225 = vshrl.u32 %v224, 7
        %v226 = vsub.s32 4, %v225
        %v227 = vrot.slane %v206, %v226
        %v228 = vlaneseq
        %v229 = vshrl.u32 %v228, 7
        %v230 = vsub.s32 5, %v229
        %v231 = vrot.slane %v206, %v230
        %v232 = vlaneseq
        %v233 = vshrl.u32 %v232, 7
        %v234 = vsub.s32 6, %v233
        %v235 = vrot.slane %v206, %v234
        %v243 = vld [vmem:[%s174] sm:$0xff]
        %v244 = vld [vmem:[%s174 + $0x8] sm:$0x3f]
        %v245 = vld [vmem:[#allocation4] sm:$0xff]
        %v246 = vld [vmem:[#allocation4 + $0x8] sm:$0xff]
        %v247 = vld [vmem:[#allocation4 + $0x10] sm:$0xff]
        %v248 = vld [vmem:[#allocation4 + $0x18] sm:$0xff]
        %v249 = vld [vmem:[#allocation4 + $0x20] sm:$0xff]
        %v250 = vld [vmem:[#allocation4 + $0x28] sm:$0xff]
        %v251 = vld [vmem:[#allocation4 + $0x30] sm:$0xff]
        %v252 = vld [vmem:[#allocation4 + $0x38] sm:$0xff]
        %v253 = vld [vmem:[#allocation4 + $0x40] sm:$0xff]
        %v254 = vld [vmem:[#allocation4 + $0x48] sm:$0xff]
        %v255 = vld [vmem:[#allocation4 + $0x50] sm:$0xff]
        %v256 = vld [vmem:[#allocation4 + $0x58] sm:$0xff]
        %v257 = vld [vmem:[#allocation4 + $0x60] sm:$0xff]
        %v258 = vld [vmem:[#allocation4 + $0x68] sm:$0xff]
        %v259 = vld [vmem:[#allocation4 + $0x70] sm:$0xff]
        %v260 = vld [vmem:[#allocation4 + $0x78] sm:$0xff]
        %v261 = vld [vmem:[#allocation4 + $0x80] sm:$0xff]
        %v262 = vld [vmem:[#allocation4 + $0x88] sm:$0xff]
        %v263 = vld [vmem:[#allocation4 + $0x90] sm:$0xff]
        %v264 = vld [vmem:[#allocation4 + $0x98] sm:$0xff]
        %v265 = vld [vmem:[#allocation4 + $0xa0] sm:$0xff]
        %v266 = vld [vmem:[#allocation4 + $0xa8] sm:$0xff]
        %v267 = vld [vmem:[#allocation4 + $0xb0] sm:$0xff]
        %v268 = vld [vmem:[#allocation4 + $0xb8] sm:$0xff]
        %v269 = vld [vmem:[#allocation4 + $0xc0] sm:$0xff]
        %v270 = vld [vmem:[#allocation4 + $0xc8] sm:$0xff]
        %v271 = vld [vmem:[#allocation4 + $0xd0] sm:$0xff]
        %v272 = vld [vmem:[#allocation4 + $0xd8] sm:$0xff]
        %v273 = vld [vmem:[#allocation4 + $0xe0] sm:$0xff]
        %v274 = vld [vmem:[#allocation4 + $0xe8] sm:$0xff]
        %v275 = vld [vmem:[#allocation4 + $0xf0] sm:$0xff]
        %v276 = vld [vmem:[#allocation4 + $0xf8] sm:$0xff]
        %v277 = vld [vmem:[#allocation4 + $0x100] sm:$0xff]
        %v278 = vld [vmem:[#allocation4 + $0x108] sm:$0xff]
        %v279 = vld [vmem:[#allocation4 + $0x110] sm:$0xff]
        %v280 = vld [vmem:[#allocation4 + $0x118] sm:$0xff]
        %v281 = vld [vmem:[#allocation4 + $0x120] sm:$0xff]
        %v282 = vld [vmem:[#allocation4 + $0x128] sm:$0xff]
        %v283 = vld [vmem:[#allocation4 + $0x130] sm:$0xff]
        %v284 = vld [vmem:[#allocation4 + $0x138] sm:$0xff]
        %v285 = vld [vmem:[#allocation4 + $0x140] sm:$0xff]
        %v286 = vld [vmem:[#allocation4 + $0x148] sm:$0xff]
        %vm287 = vcmask 392192
        %v289 = vsel %vm287, %v243, 0
        %v292 = vsel %vm287, %v244, 0
        %294 = vmatprep.subr.mxu0 %v246
        %295 = vmatpush1.msra.mxu0 %v245
        %296 = vmatprep.subr.mxu0 %v253
        %297 = vmatpush1.msra.mxu0 %v252
        %298 = vmatprep.subr.mxu0 %v260
        %299 = vmatpush1.msra.mxu0 %v259
        %300 = vmatprep.subr.mxu0 %v267
        %301 = vmatpush1.msra.mxu0 %v266
        %302 = vmatprep.subr.mxu0 %v274
        %303 = vmatpush1.msra.mxu0 %v273
        %304 = vmatprep.subr.mxu0 %v281
        %305 = vmatpush1.msra.mxu0 %v280
        %306 = vmatprep.subr.mxu0 0.0
        %307 = vmatpush1.msra.mxu0 0.0
        %308 = vmatprep.subr.mxu0 0.0
        %309 = vmatpush1.msra.mxu0 0.0
        %310 = vmatprep.subr.mxu0 0.0
        %311 = vmatpush1.msra.mxu0 0.0
        %312 = vmatprep.subr.mxu0 0.0
        %313 = vmatpush1.msra.mxu0 0.0
        %314 = vmatprep.subr.mxu0 0.0
        %315 = vmatpush1.msra.mxu0 0.0
        %316 = vmatprep.subr.mxu0 0.0
        %317 = vmatpush1.msra.mxu0 0.0
        %318 = vmatprep.subr.mxu0 0.0
        %319 = vmatpush1.msra.mxu0 0.0
        %320 = vmatprep.subr.mxu0 0.0
        %321 = vmatpush1.msra.mxu0 0.0
        %322 = vmatprep.subr.mxu0 0.0
        %323 = vmatpush1.msra.mxu0 0.0
        %324 = vmatprep.subr.mxu0 0.0
        %325 = vmatpush1.msra.mxu0 0.0
        %326 = vmatprep.subr.mxu0 0.0
        %327 = vmatpush1.msra.mxu0 0.0
        %328 = vmatprep.subr.mxu0 0.0
        %329 = vmatpush1.msra.mxu0 0.0
        %330 = vmatprep.subr.mxu0 0.0
        %331 = vmatpush1.msra.mxu0 0.0
        %332 = vmatprep.subr.mxu0 0.0
        %333 = vmatpush1.msra.mxu0 0.0
        %334 = vmatprep.subr.mxu0 0.0
        %335 = vmatpush1.msra.mxu0 0.0
        %336 = vmatprep.subr.mxu0 0.0
        %337 = vmatpush1.msra.mxu0 0.0
        %338 = vmatprep.subr.mxu0 0.0
        %339 = vmatpush1.msra.mxu0 0.0
        %340 = vmatprep.subr.mxu0 0.0
        %341 = vmatpush1.msra.mxu0 0.0
        %342 = vmatprep.subr.mxu0 0.0
        %343 = vmatpush1.msra.mxu0 0.0
        %344 = vmatprep.subr.mxu0 0.0
        %345 = vmatpush1.msra.mxu0 0.0
        %346 = vmatprep.subr.mxu0 0.0
        %347 = vmatpush1.msra.mxu0 0.0
        %348 = vmatprep.subr.mxu0 0.0
        %349 = vmatpush1.msra.mxu0 0.0
        %350 = vmatprep.subr.mxu0 0.0
        %351 = vmatpush1.msra.mxu0 0.0
        %352 = vmatprep.subr.mxu0 0.0
        %353 = vmatpush1.msra.mxu0 0.0
        %354 = vmatprep.subr.mxu0 0.0
        %355 = vmatpush1.msra.mxu0 0.0
        %356 = vmatprep.subr.mxu0 0.0
        %357 = vmatpush1.msra.mxu0 0.0
        %358 = vmatprep.mubr.f32.mxu0 0.0
        %359 = vmatmul.mubr.f32.gmra.mrb[0].mxu0 %v289
        %v360 = vpop.f32.mrb[0].mxu0
        %v361 = vadd.f32 0.0, %v360
        %v362 = vpop.f32.mrb[0].mxu0
        %v363 = vadd.f32 0.0, %v362
        %364 = vmatprep.mubr.f32.mxu0 0.0
        %365 = vmatmul.mubr.f32.gmra.mrb[0].mxu0 %v292
        %v366 = vpop.f32.mrb[0].mxu0
        %v367 = vadd.f32 0.0, %v366
        %v368 = vpop.f32.mrb[0].mxu0
        %v369 = vadd.f32 0.0, %v368
        %370 = vdwg.mxu0
        %371 = vmatprep.subr.mxu0 %v248
        %372 = vmatpush1.msra.mxu0 %v247
        %373 = vmatprep.subr.mxu0 %v255
        %374 = vmatpush1.msra.mxu0 %v254
        %375 = vmatprep.subr.mxu0 %v262
        %376 = vmatpush1.msra.mxu0 %v261
        %377 = vmatprep.subr.mxu0 %v269
        %378 = vmatpush1.msra.mxu0 %v268
        %379 = vmatprep.subr.mxu0 %v276
        %380 = vmatpush1.msra.mxu0 %v275
        %381 = vmatprep.subr.mxu0 %v283
        %382 = vmatpush1.msra.mxu0 %v282
        %383 = vmatprep.subr.mxu0 0.0
        %384 = vmatpush1.msra.mxu0 0.0
        %385 = vmatprep.subr.mxu0 0.0
        %386 = vmatpush1.msra.mxu0 0.0
        %387 = vmatprep.subr.mxu0 0.0
        %388 = vmatpush1.msra.mxu0 0.0
        %389 = vmatprep.subr.mxu0 0.0
        %390 = vmatpush1.msra.mxu0 0.0
        %391 = vmatprep.subr.mxu0 0.0
        %392 = vmatpush1.msra.mxu0 0.0
        %393 = vmatprep.subr.mxu0 0.0
        %394 = vmatpush1.msra.mxu0 0.0
        %395 = vmatprep.subr.mxu0 0.0
        %396 = vmatpush1.msra.mxu0 0.0
        %397 = vmatprep.subr.mxu0 0.0
        %398 = vmatpush1.msra.mxu0 0.0
        %399 = vmatprep.subr.mxu0 0.0
        %400 = vmatpush1.msra.mxu0 0.0
        %401 = vmatprep.subr.mxu0 0.0
        %402 = vmatpush1.msra.mxu0 0.0
        %403 = vmatprep.subr.mxu0 0.0
        %404 = vmatpush1.msra.mxu0 0.0
        %405 = vmatprep.subr.mxu0 0.0
        %406 = vmatpush1.msra.mxu0 0.0
        %407 = vmatprep.subr.mxu0 0.0
        %408 = vmatpush1.msra.mxu0 0.0
        %409 = vmatprep.subr.mxu0 0.0
        %410 = vmatpush1.msra.mxu0 0.0
        %411 = vmatprep.subr.mxu0 0.0
        %412 = vmatpush1.msra.mxu0 0.0
        %413 = vmatprep.subr.mxu0 0.0
        %414 = vmatpush1.msra.mxu0 0.0
        %415 = vmatprep.subr.mxu0 0.0
        %416 = vmatpush1.msra.mxu0 0.0
        %417 = vmatprep.subr.mxu0 0.0
        %418 = vmatpush1.msra.mxu0 0.0
        %419 = vmatprep.subr.mxu0 0.0
        %420 = vmatpush1.msra.mxu0 0.0
        %421 = vmatprep.subr.mxu0 0.0
        %422 = vmatpush1.msra.mxu0 0.0
        %423 = vmatprep.subr.mxu0 0.0
        %424 = vmatpush1.msra.mxu0 0.0
        %425 = vmatprep.subr.mxu0 0.0
        %426 = vmatpush1.msra.mxu0 0.0
        %427 = vmatprep.subr.mxu0 0.0
        %428 = vmatpush1.msra.mxu0 0.0
        %429 = vmatprep.subr.mxu0 0.0
        %430 = vmatpush1.msra.mxu0 0.0
        %431 = vmatprep.subr.mxu0 0.0
        %432 = vmatpush1.msra.mxu0 0.0
        %433 = vmatprep.subr.mxu0 0.0
        %434 = vmatpush1.msra.mxu0 0.0
        %435 = vmatprep.mubr.f32.mxu0 0.0
        %436 = vmatmul.mubr.f32.gmra.mrb[0].mxu0 %v289
        %v437 = vpop.f32.mrb[0].mxu0
        %v438 = vadd.f32 0.0, %v437
        %v439 = vpop.f32.mrb[0].mxu0
        %v440 = vadd.f32 0.0, %v439
        %441 = vmatprep.mubr.f32.mxu0 0.0
        %442 = vmatmul.mubr.f32.gmra.mrb[0].mxu0 %v292
        %v443 = vpop.f32.mrb[0].mxu0
        %v444 = vadd.f32 0.0, %v443
        %v445 = vpop.f32.mrb[0].mxu0
        %v446 = vadd.f32 0.0, %v445
        %447 = vdwg.mxu0
        %448 = vmatprep.subr.mxu0 %v250
        %449 = vmatpush1.msra.mxu0 %v249
        %450 = vmatprep.subr.mxu0 %v257
        %451 = vmatpush1.msra.mxu0 %v256
        %452 = vmatprep.subr.mxu0 %v264
        %453 = vmatpush1.msra.mxu0 %v263
        %454 = vmatprep.subr.mxu0 %v271
        %455 = vmatpush1.msra.mxu0 %v270
        %456 = vmatprep.subr.mxu0 %v278
        %457 = vmatpush1.msra.mxu0 %v277
        %458 = vmatprep.subr.mxu0 %v285
        %459 = vmatpush1.msra.mxu0 %v284
        %460 = vmatprep.subr.mxu0 0.0
        %461 = vmatpush1.msra.mxu0 0.0
        %462 = vmatprep.subr.mxu0 0.0
        %463 = vmatpush1.msra.mxu0 0.0
        %464 = vmatprep.subr.mxu0 0.0
        %465 = vmatpush1.msra.mxu0 0.0
        %466 = vmatprep.subr.mxu0 0.0
        %467 = vmatpush1.msra.mxu0 0.0
        %468 = vmatprep.subr.mxu0 0.0
        %469 = vmatpush1.msra.mxu0 0.0
        %470 = vmatprep.subr.mxu0 0.0
        %471 = vmatpush1.msra.mxu0 0.0
        %472 = vmatprep.subr.mxu0 0.0
        %473 = vmatpush1.msra.mxu0 0.0
        %474 = vmatprep.subr.mxu0 0.0
        %475 = vmatpush1.msra.mxu0 0.0
        %476 = vmatprep.subr.mxu0 0.0
        %477 = vmatpush1.msra.mxu0 0.0
        %478 = vmatprep.subr.mxu0 0.0
        %479 = vmatpush1.msra.mxu0 0.0
        %480 = vmatprep.subr.mxu0 0.0
        %481 = vmatpush1.msra.mxu0 0.0
        %482 = vmatprep.subr.mxu0 0.0
        %483 = vmatpush1.msra.mxu0 0.0
        %484 = vmatprep.subr.mxu0 0.0
        %485 = vmatpush1.msra.mxu0 0.0
        %486 = vmatprep.subr.mxu0 0.0
        %487 = vmatpush1.msra.mxu0 0.0
        %488 = vmatprep.subr.mxu0 0.0
        %489 = vmatpush1.msra.mxu0 0.0
        %490 = vmatprep.subr.mxu0 0.0
        %491 = vmatpush1.msra.mxu0 0.0
        %492 = vmatprep.subr.mxu0 0.0
        %493 = vmatpush1.msra.mxu0 0.0
        %494 = vmatprep.subr.mxu0 0.0
        %495 = vmatpush1.msra.mxu0 0.0
        %496 = vmatprep.subr.mxu0 0.0
        %497 = vmatpush1.msra.mxu0 0.0
        %498 = vmatprep.subr.mxu0 0.0
        %499 = vmatpush1.msra.mxu0 0.0
        %500 = vmatprep.subr.mxu0 0.0
        %501 = vmatpush1.msra.mxu0 0.0
        %502 = vmatprep.subr.mxu0 0.0
        %503 = vmatpush1.msra.mxu0 0.0
        %504 = vmatprep.subr.mxu0 0.0
        %505 = vmatpush1.msra.mxu0 0.0
        %506 = vmatprep.subr.mxu0 0.0
        %507 = vmatpush1.msra.mxu0 0.0
        %508 = vmatprep.subr.mxu0 0.0
        %509 = vmatpush1.msra.mxu0 0.0
        %510 = vmatprep.subr.mxu0 0.0
        %511 = vmatpush1.msra.mxu0 0.0
        %512 = vmatprep.mubr.f32.mxu0 0.0
        %513 = vmatmul.mubr.f32.gmra.mrb[0].mxu0 %v289
        %v514 = vpop.f32.mrb[0].mxu0
        %v515 = vadd.f32 0.0, %v514
        %v516 = vpop.f32.mrb[0].mxu0
        %v517 = vadd.f32 0.0, %v516
        %518 = vmatprep.mubr.f32.mxu0 0.0
        %519 = vmatmul.mubr.f32.gmra.mrb[0].mxu0 %v292
        %v520 = vpop.f32.mrb[0].mxu0
        %v521 = vadd.f32 0.0, %v520
        %v522 = vpop.f32.mrb[0].mxu0
        %v523 = vadd.f32 0.0, %v522
        %524 = vdwg.mxu0
        %525 = vmatprep.subr.mxu0 0.0
        %526 = vmatpush1.msra.mxu0 %v251
        %527 = vmatprep.subr.mxu0 0.0
        %528 = vmatpush1.msra.mxu0 %v258
        %529 = vmatprep.subr.mxu0 0.0
        %530 = vmatpush1.msra.mxu0 %v265
        %531 = vmatprep.subr.mxu0 0.0
        %532 = vmatpush1.msra.mxu0 %v272
        %533 = vmatprep.subr.mxu0 0.0
        %534 = vmatpush1.msra.mxu0 %v279
        %535 = vmatprep.subr.mxu0 0.0
        %536 = vmatpush1.msra.mxu0 %v286
        %537 = vmatprep.subr.mxu0 0.0
        %538 = vmatpush1.msra.mxu0 0.0
        %539 = vmatprep.subr.mxu0 0.0
        %540 = vmatpush1.msra.mxu0 0.0
        %541 = vmatprep.subr.mxu0 0.0
        %542 = vmatpush1.msra.mxu0 0.0
        %543 = vmatprep.subr.mxu0 0.0
        %544 = vmatpush1.msra.mxu0 0.0
        %545 = vmatprep.subr.mxu0 0.0
        %546 = vmatpush1.msra.mxu0 0.0
        %547 = vmatprep.subr.mxu0 0.0
        %548 = vmatpush1.msra.mxu0 0.0
        %549 = vmatprep.subr.mxu0 0.0
        %550 = vmatpush1.msra.mxu0 0.0
        %551 = vmatprep.subr.mxu0 0.0
        %552 = vmatpush1.msra.mxu0 0.0
        %553 = vmatprep.subr.mxu0 0.0
        %554 = vmatpush1.msra.mxu0 0.0
        %555 = vmatprep.subr.mxu0 0.0
        %556 = vmatpush1.msra.mxu0 0.0
        %557 = vmatprep.subr.mxu0 0.0
        %558 = vmatpush1.msra.mxu0 0.0
        %559 = vmatprep.subr.mxu0 0.0
        %560 = vmatpush1.msra.mxu0 0.0
        %561 = vmatprep.subr.mxu0 0.0
        %562 = vmatpush1.msra.mxu0 0.0
        %563 = vmatprep.subr.mxu0 0.0
        %564 = vmatpush1.msra.mxu0 0.0
        %565 = vmatprep.subr.mxu0 0.0
        %566 = vmatpush1.msra.mxu0 0.0
        %567 = vmatprep.subr.mxu0 0.0
        %568 = vmatpush1.msra.mxu0 0.0
        %569 = vmatprep.subr.mxu0 0.0
        %570 = vmatpush1.msra.mxu0 0.0
        %571 = vmatprep.subr.mxu0 0.0
        %572 = vmatpush1.msra.mxu0 0.0
        %573 = vmatprep.subr.mxu0 0.0
        %574 = vmatpush1.msra.mxu0 0.0
        %575 = vmatprep.subr.mxu0 0.0
        %576 = vmatpush1.msra.mxu0 0.0
        %577 = vmatprep.subr.mxu0 0.0
        %578 = vmatpush1.msra.mxu0 0.0
        %579 = vmatprep.subr.mxu0 0.0
        %580 = vmatpush1.msra.mxu0 0.0
        %581 = vmatprep.subr.mxu0 0.0
        %582 = vmatpush1.msra.mxu0 0.0
        %583 = vmatprep.subr.mxu0 0.0
        %584 = vmatpush1.msra.mxu0 0.0
        %585 = vmatprep.subr.mxu0 0.0
        %586 = vmatpush1.msra.mxu0 0.0
        %587 = vmatprep.subr.mxu0 0.0
        %588 = vmatpush1.msra.mxu0 0.0
        %589 = vmatprep.mubr.f32.mxu0 0.0
        %590 = vmatmul.mubr.f32.gmra.mrb[0].mxu0 %v289
        %v591 = vpop.f32.mrb[0].mxu0
        %v592 = vadd.f32 0.0, %v591
        %v593 = vpop.f32.mrb[0].mxu0
        %594 = vmatprep.mubr.f32.mxu0 0.0
        %595 = vmatmul.mubr.f32.gmra.mrb[0].mxu0 %v292
        %v596 = vpop.f32.mrb[0].mxu0
        %v597 = vadd.f32 0.0, %v596
        %v598 = vpop.f32.mrb[0].mxu0
        %599 = vdwg.mxu0
        %v600 = vadd.f32 %v211, %v361
        %v601 = vadd.f32 %v215, %v363
        %v602 = vadd.f32 %v219, %v438
        %v603 = vadd.f32 %v223, %v440
        %v604 = vadd.f32 %v227, %v515
        %v605 = vadd.f32 %v231, %v517
        %v606 = vadd.f32 %v235, %v592
        %v607 = vadd.f32 %v211, %v367
        %v608 = vadd.f32 %v215, %v369
        %v609 = vadd.f32 %v219, %v444
        %v610 = vadd.f32 %v223, %v446
        %v611 = vadd.f32 %v227, %v521
        %v612 = vadd.f32 %v231, %v523
        %v613 = vadd.f32 %v235, %v597
        %v614 = vld [vmem:[%s174 + $0x1] sm:$0xff]
        %v615 = vld [vmem:[%s174 + $0x9] sm:$0x3f]
        %s616 = scalar_lea.vmem [#allocation4], 336
        %v617 = vld [vmem:[%s616] sm:$0xff]
        %v618 = vld [vmem:[%s616 + $0x8] sm:$0xff]
        %v619 = vld [vmem:[%s616 + $0x10] sm:$0xff]
        %v620 = vld [vmem:[%s616 + $0x18] sm:$0xff]
        %v621 = vld [vmem:[%s616 + $0x20] sm:$0xff]
        %v622 = vld [vmem:[%s616 + $0x28] sm:$0xff]
        %v623 = vld [vmem:[%s616 + $0x30] sm:$0xff]
        %v624 = vld [vmem:[%s616 + $0x38] sm:$0xff]
        %v625 = vld [vmem:[%s616 + $0x40] sm:$0xff]
        %v626 = vld [vmem:[%s616 + $0x48] sm:$0xff]
        %v627 = vld [vmem:[%s616 + $0x50] sm:$0xff]
        %v628 = vld [vmem:[%s616 + $0x58] sm:$0xff]
        %v629 = vld [vmem:[%s616 + $0x60] sm:$0xff]
        %v630 = vld [vmem:[%s616 + $0x68] sm:$0xff]
        %v631 = vld [vmem:[%s616 + $0x70] sm:$0xff]
        %v632 = vld [vmem:[%s616 + $0x78] sm:$0xff]
        %v633 = vld [vmem:[%s616 + $0x80] sm:$0xff]
        %v634 = vld [vmem:[%s616 + $0x88] sm:$0xff]
        %v635 = vld [vmem:[%s616 + $0x90] sm:$0xff]
        %v636 = vld [vmem:[%s616 + $0x98] sm:$0xff]
        %v637 = vld [vmem:[%s616 + $0xa0] sm:$0xff]
        %v638 = vld [vmem:[%s616 + $0xa8] sm:$0xff]
        %v639 = vld [vmem:[%s616 + $0xb0] sm:$0xff]
        %v640 = vld [vmem:[%s616 + $0xb8] sm:$0xff]
        %v641 = vld [vmem:[%s616 + $0xc0] sm:$0xff]
        %v642 = vld [vmem:[%s616 + $0xc8] sm:$0xff]
        %v643 = vld [vmem:[%s616 + $0xd0] sm:$0xff]
        %v644 = vld [vmem:[%s616 + $0xd8] sm:$0xff]
        %v645 = vld [vmem:[%s616 + $0xe0] sm:$0xff]
        %v646 = vld [vmem:[%s616 + $0xe8] sm:$0xff]
        %v647 = vld [vmem:[%s616 + $0xf0] sm:$0xff]
        %v648 = vld [vmem:[%s616 + $0xf8] sm:$0xff]
        %v649 = vld [vmem:[%s616 + $0x100] sm:$0xff]
        %v650 = vld [vmem:[%s616 + $0x108] sm:$0xff]
        %v651 = vld [vmem:[%s616 + $0x110] sm:$0xff]
        %v652 = vld [vmem:[%s616 + $0x118] sm:$0xff]
        %v653 = vld [vmem:[%s616 + $0x120] sm:$0xff]
        %v654 = vld [vmem:[%s616 + $0x128] sm:$0xff]
        %v655 = vld [vmem:[%s616 + $0x130] sm:$0xff]
        %v656 = vld [vmem:[%s616 + $0x138] sm:$0xff]
        %v657 = vld [vmem:[%s616 + $0x140] sm:$0xff]
        %v658 = vld [vmem:[%s616 + $0x148] sm:$0xff]
        %v660 = vsel %vm287, %v614, 0
        %v663 = vsel %vm287, %v615, 0
        %665 = vmatprep.subr.mxu0 %v618
        %666 = vmatpush1.msra.mxu0 %v617
        %667 = vmatprep.subr.mxu0 %v625
        %668 = vmatpush1.msra.mxu0 %v624
        %669 = vmatprep.subr.mxu0 %v632
        %670 = vmatpush1.msra.mxu0 %v631
        %671 = vmatprep.subr.mxu0 %v639
        %672 = vmatpush1.msra.mxu0 %v638
        %673 = vmatprep.subr.mxu0 %v646
        %674 = vmatpush1.msra.mxu0 %v645
        %675 = vmatprep.subr.mxu0 %v653
        %676 = vmatpush1.msra.mxu0 %v652
        %677 = vmatprep.subr.mxu0 0.0
        %678 = vmatpush1.msra.mxu0 0.0
        %679 = vmatprep.subr.mxu0 0.0
        %680 = vmatpush1.msra.mxu0 0.0
        %681 = vmatprep.subr.mxu0 0.0
        %682 = vmatpush1.msra.mxu0 0.0
        %683 = vmatprep.subr.mxu0 0.0
        %684 = vmatpush1.msra.mxu0 0.0
        %685 = vmatprep.subr.mxu0 0.0
        %686 = vmatpush1.msra.mxu0 0.0
        %687 = vmatprep.subr.mxu0 0.0
        %688 = vmatpush1.msra.mxu0 0.0
        %689 = vmatprep.subr.mxu0 0.0
        %690 = vmatpush1.msra.mxu0 0.0
        %691 = vmatprep.subr.mxu0 0.0
        %692 = vmatpush1.msra.mxu0 0.0
        %693 = vmatprep.subr.mxu0 0.0
        %694 = vmatpush1.msra.mxu0 0.0
        %695 = vmatprep.subr.mxu0 0.0
        %696 = vmatpush1.msra.mxu0 0.0
        %697 = vmatprep.subr.mxu0 0.0
        %698 = vmatpush1.msra.mxu0 0.0
        %699 = vmatprep.subr.mxu0 0.0
        %700 = vmatpush1.msra.mxu0 0.0
        %701 = vmatprep.subr.mxu0 0.0
        %702 = vmatpush1.msra.mxu0 0.0
        %703 = vmatprep.subr.mxu0 0.0
        %704 = vmatpush1.msra.mxu0 0.0
        %705 = vmatprep.subr.mxu0 0.0
        %706 = vmatpush1.msra.mxu0 0.0
        %707 = vmatprep.subr.mxu0 0.0
        %708 = vmatpush1.msra.mxu0 0.0
        %709 = vmatprep.subr.mxu0 0.0
        %710 = vmatpush1.msra.mxu0 0.0
        %711 = vmatprep.subr.mxu0 0.0
        %712 = vmatpush1.msra.mxu0 0.0
        %713 = vmatprep.subr.mxu0 0.0
        %714 = vmatpush1.msra.mxu0 0.0
        %715 = vmatprep.subr.mxu0 0.0
        %716 = vmatpush1.msra.mxu0 0.0
        %717 = vmatprep.subr.mxu0 0.0
        %718 = vmatpush1.msra.mxu0 0.0
        %719 = vmatprep.subr.mxu0 0.0
        %720 = vmatpush1.msra.mxu0 0.0
        %721 = vmatprep.subr.mxu0 0.0
        %722 = vmatpush1.msra.mxu0 0.0
        %723 = vmatprep.subr.mxu0 0.0
        %724 = vmatpush1.msra.mxu0 0.0
        %725 = vmatprep.subr.mxu0 0.0
        %726 = vmatpush1.msra.mxu0 0.0
        %727 = vmatprep.subr.mxu0 0.0
        %728 = vmatpush1.msra.mxu0 0.0
        %729 = vmatprep.mubr.f32.mxu0 0.0
        %730 = vmatmul.mubr.f32.gmra.mrb[0].mxu0 %v660
        %v731 = vpop.f32.mrb[0].mxu0
        %v732 = vadd.f32 0.0, %v731
        %v733 = vpop.f32.mrb[0].mxu0
        %v734 = vadd.f32 0.0, %v733
        %735 = vmatprep.mubr.f32.mxu0 0.0
        %736 = vmatmul.mubr.f32.gmra.mrb[0].mxu0 %v663
        %v737 = vpop.f32.mrb[0].mxu0
        %v738 = vadd.f32 0.0, %v737
        %v739 = vpop.f32.mrb[0].mxu0
        %v740 = vadd.f32 0.0, %v739
        %741 = vdwg.mxu0
        %742 = vmatprep.subr.mxu0 %v620
        %743 = vmatpush1.msra.mxu0 %v619
        %744 = vmatprep.subr.mxu0 %v627
        %745 = vmatpush1.msra.mxu0 %v626
        %746 = vmatprep.subr.mxu0 %v634
        %747 = vmatpush1.msra.mxu0 %v633
        %748 = vmatprep.subr.mxu0 %v641
        %749 = vmatpush1.msra.mxu0 %v640
        %750 = vmatprep.subr.mxu0 %v648
        %751 = vmatpush1.msra.mxu0 %v647
        %752 = vmatprep.subr.mxu0 %v655
        %753 = vmatpush1.msra.mxu0 %v654
        %754 = vmatprep.subr.mxu0 0.0
        %755 = vmatpush1.msra.mxu0 0.0
        %756 = vmatprep.subr.mxu0 0.0
        %757 = vmatpush1.msra.mxu0 0.0
        %758 = vmatprep.subr.mxu0 0.0
        %759 = vmatpush1.msra.mxu0 0.0
        %760 = vmatprep.subr.mxu0 0.0
        %761 = vmatpush1.msra.mxu0 0.0
        %762 = vmatprep.subr.mxu0 0.0
        %763 = vmatpush1.msra.mxu0 0.0
        %764 = vmatprep.subr.mxu0 0.0
        %765 = vmatpush1.msra.mxu0 0.0
        %766 = vmatprep.subr.mxu0 0.0
        %767 = vmatpush1.msra.mxu0 0.0
        %768 = vmatprep.subr.mxu0 0.0
        %769 = vmatpush1.msra.mxu0 0.0
        %770 = vmatprep.subr.mxu0 0.0
        %771 = vmatpush1.msra.mxu0 0.0
        %772 = vmatprep.subr.mxu0 0.0
        %773 = vmatpush1.msra.mxu0 0.0
        %774 = vmatprep.subr.mxu0 0.0
        %775 = vmatpush1.msra.mxu0 0.0
        %776 = vmatprep.subr.mxu0 0.0
        %777 = vmatpush1.msra.mxu0 0.0
        %778 = vmatprep.subr.mxu0 0.0
        %779 = vmatpush1.msra.mxu0 0.0
        %780 = vmatprep.subr.mxu0 0.0
        %781 = vmatpush1.msra.mxu0 0.0
        %782 = vmatprep.subr.mxu0 0.0
        %783 = vmatpush1.msra.mxu0 0.0
        %784 = vmatprep.subr.mxu0 0.0
        %785 = vmatpush1.msra.mxu0 0.0
        %786 = vmatprep.subr.mxu0 0.0
        %787 = vmatpush1.msra.mxu0 0.0
        %788 = vmatprep.subr.mxu0 0.0
        %789 = vmatpush1.msra.mxu0 0.0
        %790 = vmatprep.subr.mxu0 0.0
        %791 = vmatpush1.msra.mxu0 0.0
        %792 = vmatprep.subr.mxu0 0.0
        %793 = vmatpush1.msra.mxu0 0.0
        %794 = vmatprep.subr.mxu0 0.0
        %795 = vmatpush1.msra.mxu0 0.0
        %796 = vmatprep.subr.mxu0 0.0
        %797 = vmatpush1.msra.mxu0 0.0
        %798 = vmatprep.subr.mxu0 0.0
        %799 = vmatpush1.msra.mxu0 0.0
        %800 = vmatprep.subr.mxu0 0.0
        %801 = vmatpush1.msra.mxu0 0.0
        %802 = vmatprep.subr.mxu0 0.0
        %803 = vmatpush1.msra.mxu0 0.0
        %804 = vmatprep.subr.mxu0 0.0
        %805 = vmatpush1.msra.mxu0 0.0
        %806 = vmatprep.mubr.f32.mxu0 0.0
        %807 = vmatmul.mubr.f32.gmra.mrb[0].mxu0 %v660
        %v808 = vpop.f32.mrb[0].mxu0
        %v809 = vadd.f32 0.0, %v808
        %v810 = vpop.f32.mrb[0].mxu0
        %v811 = vadd.f32 0.0, %v810
        %812 = vmatprep.mubr.f32.mxu0 0.0
        %813 = vmatmul.mubr.f32.gmra.mrb[0].mxu0 %v663
        %v814 = vpop.f32.mrb[0].mxu0
        %v815 = vadd.f32 0.0, %v814
        %v816 = vpop.f32.mrb[0].mxu0
        %v817 = vadd.f32 0.0, %v816
        %818 = vdwg.mxu0
        %819 = vmatprep.subr.mxu0 %v622
        %820 = vmatpush1.msra.mxu0 %v621
        %821 = vmatprep.subr.mxu0 %v629
        %822 = vmatpush1.msra.mxu0 %v628
        %823 = vmatprep.subr.mxu0 %v636
        %824 = vmatpush1.msra.mxu0 %v635
        %825 = vmatprep.subr.mxu0 %v643
        %826 = vmatpush1.msra.mxu0 %v642
        %827 = vmatprep.subr.mxu0 %v650
        %828 = vmatpush1.msra.mxu0 %v649
        %829 = vmatprep.subr.mxu0 %v657
        %830 = vmatpush1.msra.mxu0 %v656
        %831 = vmatprep.subr.mxu0 0.0
        %832 = vmatpush1.msra.mxu0 0.0
        %833 = vmatprep.subr.mxu0 0.0
        %834 = vmatpush1.msra.mxu0 0.0
        %835 = vmatprep.subr.mxu0 0.0
        %836 = vmatpush1.msra.mxu0 0.0
        %837 = vmatprep.subr.mxu0 0.0
        %838 = vmatpush1.msra.mxu0 0.0
        %839 = vmatprep.subr.mxu0 0.0
        %840 = vmatpush1.msra.mxu0 0.0
        %841 = vmatprep.subr.mxu0 0.0
        %842 = vmatpush1.msra.mxu0 0.0
        %843 = vmatprep.subr.mxu0 0.0
        %844 = vmatpush1.msra.mxu0 0.0
        %845 = vmatprep.subr.mxu0 0.0
        %846 = vmatpush1.msra.mxu0 0.0
        %847 = vmatprep.subr.mxu0 0.0
        %848 = vmatpush1.msra.mxu0 0.0
        %849 = vmatprep.subr.mxu0 0.0
        %850 = vmatpush1.msra.mxu0 0.0
        %851 = vmatprep.subr.mxu0 0.0
        %852 = vmatpush1.msra.mxu0 0.0
        %853 = vmatprep.subr.mxu0 0.0
        %854 = vmatpush1.msra.mxu0 0.0
        %855 = vmatprep.subr.mxu0 0.0
        %856 = vmatpush1.msra.mxu0 0.0
        %857 = vmatprep.subr.mxu0 0.0
        %858 = vmatpush1.msra.mxu0 0.0
        %859 = vmatprep.subr.mxu0 0.0
        %860 = vmatpush1.msra.mxu0 0.0
        %861 = vmatprep.subr.mxu0 0.0
        %862 = vmatpush1.msra.mxu0 0.0
        %863 = vmatprep.subr.mxu0 0.0
        %864 = vmatpush1.msra.mxu0 0.0
        %865 = vmatprep.subr.mxu0 0.0
        %866 = vmatpush1.msra.mxu0 0.0
        %867 = vmatprep.subr.mxu0 0.0
        %868 = vmatpush1.msra.mxu0 0.0
        %869 = vmatprep.subr.mxu0 0.0
        %870 = vmatpush1.msra.mxu0 0.0
        %871 = vmatprep.subr.mxu0 0.0
        %872 = vmatpush1.msra.mxu0 0.0
        %873 = vmatprep.subr.mxu0 0.0
        %874 = vmatpush1.msra.mxu0 0.0
        %875 = vmatprep.subr.mxu0 0.0
        %876 = vmatpush1.msra.mxu0 0.0
        %877 = vmatprep.subr.mxu0 0.0
        %878 = vmatpush1.msra.mxu0 0.0
        %879 = vmatprep.subr.mxu0 0.0
        %880 = vmatpush1.msra.mxu0 0.0
        %881 = vmatprep.subr.mxu0 0.0
        %882 = vmatpush1.msra.mxu0 0.0
        %883 = vmatprep.mubr.f32.mxu0 0.0
        %884 = vmatmul.mubr.f32.gmra.mrb[0].mxu0 %v660
        %v885 = vpop.f32.mrb[0].mxu0
        %v886 = vadd.f32 0.0, %v885
        %v887 = vpop.f32.mrb[0].mxu0
        %v888 = vadd.f32 0.0, %v887
        %889 = vmatprep.mubr.f32.mxu0 0.0
        %890 = vmatmul.mubr.f32.gmra.mrb[0].mxu0 %v663
        %v891 = vpop.f32.mrb[0].mxu0
        %v892 = vadd.f32 0.0, %v891
        %v893 = vpop.f32.mrb[0].mxu0
        %v894 = vadd.f32 0.0, %v893
        %895 = vdwg.mxu0
        %896 = vmatprep.subr.mxu0 0.0
        %897 = vmatpush1.msra.mxu0 %v623
        %898 = vmatprep.subr.mxu0 0.0
        %899 = vmatpush1.msra.mxu0 %v630
        %900 = vmatprep.subr.mxu0 0.0
        %901 = vmatpush1.msra.mxu0 %v637
        %902 = vmatprep.subr.mxu0 0.0
        %903 = vmatpush1.msra.mxu0 %v644
        %904 = vmatprep.subr.mxu0 0.0
        %905 = vmatpush1.msra.mxu0 %v651
        %906 = vmatprep.subr.mxu0 0.0
        %907 = vmatpush1.msra.mxu0 %v658
        %908 = vmatprep.subr.mxu0 0.0
        %909 = vmatpush1.msra.mxu0 0.0
        %910 = vmatprep.subr.mxu0 0.0
        %911 = vmatpush1.msra.mxu0 0.0
        %912 = vmatprep.subr.mxu0 0.0
        %913 = vmatpush1.msra.mxu0 0.0
        %914 = vmatprep.subr.mxu0 0.0
        %915 = vmatpush1.msra.mxu0 0.0
        %916 = vmatprep.subr.mxu0 0.0
        %917 = vmatpush1.msra.mxu0 0.0
        %918 = vmatprep.subr.mxu0 0.0
        %919 = vmatpush1.msra.mxu0 0.0
        %920 = vmatprep.subr.mxu0 0.0
        %921 = vmatpush1.msra.mxu0 0.0
        %922 = vmatprep.subr.mxu0 0.0
        %923 = vmatpush1.msra.mxu0 0.0
        %924 = vmatprep.subr.mxu0 0.0
        %925 = vmatpush1.msra.mxu0 0.0
        %926 = vmatprep.subr.mxu0 0.0
        %927 = vmatpush1.msra.mxu0 0.0
        %928 = vmatprep.subr.mxu0 0.0
        %929 = vmatpush1.msra.mxu0 0.0
        %930 = vmatprep.subr.mxu0 0.0
        %931 = vmatpush1.msra.mxu0 0.0
        %932 = vmatprep.subr.mxu0 0.0
        %933 = vmatpush1.msra.mxu0 0.0
        %934 = vmatprep.subr.mxu0 0.0
        %935 = vmatpush1.msra.mxu0 0.0
        %936 = vmatprep.subr.mxu0 0.0
        %937 = vmatpush1.msra.mxu0 0.0
        %938 = vmatprep.subr.mxu0 0.0
        %939 = vmatpush1.msra.mxu0 0.0
        %940 = vmatprep.subr.mxu0 0.0
        %941 = vmatpush1.msra.mxu0 0.0
        %942 = vmatprep.subr.mxu0 0.0
        %943 = vmatpush1.msra.mxu0 0.0
        %944 = vmatprep.subr.mxu0 0.0
        %945 = vmatpush1.msra.mxu0 0.0
        %946 = vmatprep.subr.mxu0 0.0
        %947 = vmatpush1.msra.mxu0 0.0
        %948 = vmatprep.subr.mxu0 0.0
        %949 = vmatpush1.msra.mxu0 0.0
        %950 = vmatprep.subr.mxu0 0.0
        %951 = vmatpush1.msra.mxu0 0.0
        %952 = vmatprep.subr.mxu0 0.0
        %953 = vmatpush1.msra.mxu0 0.0
        %954 = vmatprep.subr.mxu0 0.0
        %955 = vmatpush1.msra.mxu0 0.0
        %956 = vmatprep.subr.mxu0 0.0
        %957 = vmatpush1.msra.mxu0 0.0
        %958 = vmatprep.subr.mxu0 0.0
        %959 = vmatpush1.msra.mxu0 0.0
        %960 = vmatprep.mubr.f32.mxu0 0.0
        %961 = vmatmul.mubr.f32.gmra.mrb[0].mxu0 %v660
        %v962 = vpop.f32.mrb[0].mxu0
        %v963 = vadd.f32 0.0, %v962
        %v964 = vpop.f32.mrb[0].mxu0
        %965 = vmatprep.mubr.f32.mxu0 0.0
        %966 = vmatmul.mubr.f32.gmra.mrb[0].mxu0 %v663
        %v967 = vpop.f32.mrb[0].mxu0
        %v968 = vadd.f32 0.0, %v967
        %v969 = vpop.f32.mrb[0].mxu0
        %970 = vdwg.mxu0
        %v971 = vadd.f32 %v600, %v732
        %v972 = vadd.f32 %v601, %v734
        %v973 = vadd.f32 %v602, %v809
        %v974 = vadd.f32 %v603, %v811
        %v975 = vadd.f32 %v604, %v886
        %v976 = vadd.f32 %v605, %v888
        %v977 = vadd.f32 %v606, %v963
        %v978 = vadd.f32 %v607, %v738
        %v979 = vadd.f32 %v608, %v740
        %v980 = vadd.f32 %v609, %v815
        %v981 = vadd.f32 %v610, %v817
        %v982 = vadd.f32 %v611, %v892
        %v983 = vadd.f32 %v612, %v894
        %v984 = vadd.f32 %v613, %v968
        %v985 = vld [vmem:[%s174 + $0x2] sm:$0xff]
        %v986 = vld [vmem:[%s174 + $0xa] sm:$0x3f]
        %s987 = scalar_lea.vmem [#allocation4], 672
        %v988 = vld [vmem:[%s987] sm:$0xff]
        %v989 = vld [vmem:[%s987 + $0x8] sm:$0xff]
        %v990 = vld [vmem:[%s987 + $0x10] sm:$0xff]
        %v991 = vld [vmem:[%s987 + $0x18] sm:$0xff]
        %v992 = vld [vmem:[%s987 + $0x20] sm:$0xff]
        %v993 = vld [vmem:[%s987 + $0x28] sm:$0xff]
        %v994 = vld [vmem:[%s987 + $0x30] sm:$0xff]
        %v995 = vld [vmem:[%s987 + $0x38] sm:$0xff]
        %v996 = vld [vmem:[%s987 + $0x40] sm:$0xff]
        %v997 = vld [vmem:[%s987 + $0x48] sm:$0xff]
        %v998 = vld [vmem:[%s987 + $0x50] sm:$0xff]
        %v999 = vld [vmem:[%s987 + $0x58] sm:$0xff]
        %v1000 = vld [vmem:[%s987 + $0x60] sm:$0xff]
        %v1001 = vld [vmem:[%s987 + $0x68] sm:$0xff]
        %v1002 = vld [vmem:[%s987 + $0x70] sm:$0xff]
        %v1003 = vld [vmem:[%s987 + $0x78] sm:$0xff]
        %v1004 = vld [vmem:[%s987 + $0x80] sm:$0xff]
        %v1005 = vld [vmem:[%s987 + $0x88] sm:$0xff]
        %v1006 = vld [vmem:[%s987 + $0x90] sm:$0xff]
        %v1007 = vld [vmem:[%s987 + $0x98] sm:$0xff]
        %v1008 = vld [vmem:[%s987 + $0xa0] sm:$0xff]
        %v1009 = vld [vmem:[%s987 + $0xa8] sm:$0xff]
        %v1010 = vld [vmem:[%s987 + $0xb0] sm:$0xff]
        %v1011 = vld [vmem:[%s987 + $0xb8] sm:$0xff]
        %v1012 = vld [vmem:[%s987 + $0xc0] sm:$0xff]
        %v1013 = vld [vmem:[%s987 + $0xc8] sm:$0xff]
        %v1014 = vld [vmem:[%s987 + $0xd0] sm:$0xff]
        %v1015 = vld [vmem:[%s987 + $0xd8] sm:$0xff]
        %v1016 = vld [vmem:[%s987 + $0xe0] sm:$0xff]
        %v1017 = vld [vmem:[%s987 + $0xe8] sm:$0xff]
        %v1018 = vld [vmem:[%s987 + $0xf0] sm:$0xff]
        %v1019 = vld [vmem:[%s987 + $0xf8] sm:$0xff]
        %v1020 = vld [vmem:[%s987 + $0x100] sm:$0xff]
        %v1021 = vld [vmem:[%s987 + $0x108] sm:$0xff]
        %v1022 = vld [vmem:[%s987 + $0x110] sm:$0xff]
        %v1023 = vld [vmem:[%s987 + $0x118] sm:$0xff]
        %v1024 = vld [vmem:[%s987 + $0x120] sm:$0xff]
        %v1025 = vld [vmem:[%s987 + $0x128] sm:$0xff]
        %v1026 = vld [vmem:[%s987 + $0x130] sm:$0xff]
        %v1027 = vld [vmem:[%s987 + $0x138] sm:$0xff]
        %v1028 = vld [vmem:[%s987 + $0x140] sm:$0xff]
        %v1029 = vld [vmem:[%s987 + $0x148] sm:$0xff]
        %v1031 = vsel %vm287, %v985, 0
        %v1034 = vsel %vm287, %v986, 0
        %1036 = vmatprep.subr.mxu0 %v989
        %1037 = vmatpush1.msra.mxu0 %v988
        %1038 = vmatprep.subr.mxu0 %v996
        %1039 = vmatpush1.msra.mxu0 %v995
        %1040 = vmatprep.subr.mxu0 %v1003
        %1041 = vmatpush1.msra.mxu0 %v1002
        %1042 = vmatprep.subr.mxu0 %v1010
        %1043 = vmatpush1.msra.mxu0 %v1009
        %1044 = vmatprep.subr.mxu0 %v1017
        %1045 = vmatpush1.msra.mxu0 %v1016
        %1046 = vmatprep.subr.mxu0 %v1024
        %1047 = vmatpush1.msra.mxu0 %v1023
        %1048 = vmatprep.subr.mxu0 0.0
        %1049 = vmatpush1.msra.mxu0 0.0
        %1050 = vmatprep.subr.mxu0 0.0
        %1051 = vmatpush1.msra.mxu0 0.0
        %1052 = vmatprep.subr.mxu0 0.0
        %1053 = vmatpush1.msra.mxu0 0.0
        %1054 = vmatprep.subr.mxu0 0.0
        %1055 = vmatpush1.msra.mxu0 0.0
        %1056 = vmatprep.subr.mxu0 0.0
        %1057 = vmatpush1.msra.mxu0 0.0
        %1058 = vmatprep.subr.mxu0 0.0
        %1059 = vmatpush1.msra.mxu0 0.0
        %1060 = vmatprep.subr.mxu0 0.0
        %1061 = vmatpush1.msra.mxu0 0.0
        %1062 = vmatprep.subr.mxu0 0.0
        %1063 = vmatpush1.msra.mxu0 0.0
        %1064 = vmatprep.subr.mxu0 0.0
        %1065 = vmatpush1.msra.mxu0 0.0
        %1066 = vmatprep.subr.mxu0 0.0
        %1067 = vmatpush1.msra.mxu0 0.0
        %1068 = vmatprep.subr.mxu0 0.0
        %1069 = vmatpush1.msra.mxu0 0.0
        %1070 = vmatprep.subr.mxu0 0.0
        %1071 = vmatpush1.msra.mxu0 0.0
        %1072 = vmatprep.subr.mxu0 0.0
        %1073 = vmatpush1.msra.mxu0 0.0
        %1074 = vmatprep.subr.mxu0 0.0
        %1075 = vmatpush1.msra.mxu0 0.0
        %1076 = vmatprep.subr.mxu0 0.0
        %1077 = vmatpush1.msra.mxu0 0.0
        %1078 = vmatprep.subr.mxu0 0.0
        %1079 = vmatpush1.msra.mxu0 0.0
        %1080 = vmatprep.subr.mxu0 0.0
        %1081 = vmatpush1.msra.mxu0 0.0
        %1082 = vmatprep.subr.mxu0 0.0
        %1083 = vmatpush1.msra.mxu0 0.0
        %1084 = vmatprep.subr.mxu0 0.0
        %1085 = vmatpush1.msra.mxu0 0.0
        %1086 = vmatprep.subr.mxu0 0.0
        %1087 = vmatpush1.msra.mxu0 0.0
        %1088 = vmatprep.subr.mxu0 0.0
        %1089 = vmatpush1.msra.mxu0 0.0
        %1090 = vmatprep.subr.mxu0 0.0
        %1091 = vmatpush1.msra.mxu0 0.0
        %1092 = vmatprep.subr.mxu0 0.0
        %1093 = vmatpush1.msra.mxu0 0.0
        %1094 = vmatprep.subr.mxu0 0.0
        %1095 = vmatpush1.msra.mxu0 0.0
        %1096 = vmatprep.subr.mxu0 0.0
        %1097 = vmatpush1.msra.mxu0 0.0
        %1098 = vmatprep.subr.mxu0 0.0
        %1099 = vmatpush1.msra.mxu0 0.0
        %1100 = vmatprep.mubr.f32.mxu0 0.0
        %1101 = vmatmul.mubr.f32.gmra.mrb[0].mxu0 %v1031
        %v1102 = vpop.f32.mrb[0].mxu0
        %v1103 = vadd.f32 0.0, %v1102
        %v1104 = vpop.f32.mrb[0].mxu0
        %v1105 = vadd.f32 0.0, %v1104
        %1106 = vmatprep.mubr.f32.mxu0 0.0
        %1107 = vmatmul.mubr.f32.gmra.mrb[0].mxu0 %v1034
        %v1108 = vpop.f32.mrb[0].mxu0
        %v1109 = vadd.f32 0.0, %v1108
        %v1110 = vpop.f32.mrb[0].mxu0
        %v1111 = vadd.f32 0.0, %v1110
        %1112 = vdwg.mxu0
        %1113 = vmatprep.subr.mxu0 %v991
        %1114 = vmatpush1.msra.mxu0 %v990
        %1115 = vmatprep.subr.mxu0 %v998
        %1116 = vmatpush1.msra.mxu0 %v997
        %1117 = vmatprep.subr.mxu0 %v1005
        %1118 = vmatpush1.msra.mxu0 %v1004
        %1119 = vmatprep.subr.mxu0 %v1012
        %1120 = vmatpush1.msra.mxu0 %v1011
        %1121 = vmatprep.subr.mxu0 %v1019
        %1122 = vmatpush1.msra.mxu0 %v1018
        %1123 = vmatprep.subr.mxu0 %v1026
        %1124 = vmatpush1.msra.mxu0 %v1025
        %1125 = vmatprep.subr.mxu0 0.0
        %1126 = vmatpush1.msra.mxu0 0.0
        %1127 = vmatprep.subr.mxu0 0.0
        %1128 = vmatpush1.msra.mxu0 0.0
        %1129 = vmatprep.subr.mxu0 0.0
        %1130 = vmatpush1.msra.mxu0 0.0
        %1131 = vmatprep.subr.mxu0 0.0
        %1132 = vmatpush1.msra.mxu0 0.0
        %1133 = vmatprep.subr.mxu0 0.0
        %1134 = vmatpush1.msra.mxu0 0.0
        %1135 = vmatprep.subr.mxu0 0.0
        %1136 = vmatpush1.msra.mxu0 0.0
        %1137 = vmatprep.subr.mxu0 0.0
        %1138 = vmatpush1.msra.mxu0 0.0
        %1139 = vmatprep.subr.mxu0 0.0
        %1140 = vmatpush1.msra.mxu0 0.0
        %1141 = vmatprep.subr.mxu0 0.0
        %1142 = vmatpush1.msra.mxu0 0.0
        %1143 = vmatprep.subr.mxu0 0.0
        %1144 = vmatpush1.msra.mxu0 0.0
        %1145 = vmatprep.subr.mxu0 0.0
        %1146 = vmatpush1.msra.mxu0 0.0
        %1147 = vmatprep.subr.mxu0 0.0
        %1148 = vmatpush1.msra.mxu0 0.0
        %1149 = vmatprep.subr.mxu0 0.0
        %1150 = vmatpush1.msra.mxu0 0.0
        %1151 = vmatprep.subr.mxu0 0.0
        %1152 = vmatpush1.msra.mxu0 0.0
        %1153 = vmatprep.subr.mxu0 0.0
        %1154 = vmatpush1.msra.mxu0 0.0
        %1155 = vmatprep.subr.mxu0 0.0
        %1156 = vmatpush1.msra.mxu0 0.0
        %1157 = vmatprep.subr.mxu0 0.0
        %1158 = vmatpush1.msra.mxu0 0.0
        %1159 = vmatprep.subr.mxu0 0.0
        %1160 = vmatpush1.msra.mxu0 0.0
        %1161 = vmatprep.subr.mxu0 0.0
        %1162 = vmatpush1.msra.mxu0 0.0
        %1163 = vmatprep.subr.mxu0 0.0
        %1164 = vmatpush1.msra.mxu0 0.0
        %1165 = vmatprep.subr.mxu0 0.0
        %1166 = vmatpush1.msra.mxu0 0.0
        %1167 = vmatprep.subr.mxu0 0.0
        %1168 = vmatpush1.msra.mxu0 0.0
        %1169 = vmatprep.subr.mxu0 0.0
        %1170 = vmatpush1.msra.mxu0 0.0
        %1171 = vmatprep.subr.mxu0 0.0
        %1172 = vmatpush1.msra.mxu0 0.0
        %1173 = vmatprep.subr.mxu0 0.0
        %1174 = vmatpush1.msra.mxu0 0.0
        %1175 = vmatprep.subr.mxu0 0.0
        %1176 = vmatpush1.msra.mxu0 0.0
        %1177 = vmatprep.mubr.f32.mxu0 0.0
        %1178 = vmatmul.mubr.f32.gmra.mrb[0].mxu0 %v1031
        %v1179 = vpop.f32.mrb[0].mxu0
        %v1180 = vadd.f32 0.0, %v1179
        %v1181 = vpop.f32.mrb[0].mxu0
        %v1182 = vadd.f32 0.0, %v1181
        %1183 = vmatprep.mubr.f32.mxu0 0.0
        %1184 = vmatmul.mubr.f32.gmra.mrb[0].mxu0 %v1034
        %v1185 = vpop.f32.mrb[0].mxu0
        %v1186 = vadd.f32 0.0, %v1185
        %v1187 = vpop.f32.mrb[0].mxu0
        %v1188 = vadd.f32 0.0, %v1187
        %1189 = vdwg.mxu0
        %1190 = vmatprep.subr.mxu0 %v993
        %1191 = vmatpush1.msra.mxu0 %v992
        %1192 = vmatprep.subr.mxu0 %v1000
        %1193 = vmatpush1.msra.mxu0 %v999
        %1194 = vmatprep.subr.mxu0 %v1007
        %1195 = vmatpush1.msra.mxu0 %v1006
        %1196 = vmatprep.subr.mxu0 %v1014
        %1197 = vmatpush1.msra.mxu0 %v1013
        %1198 = vmatprep.subr.mxu0 %v1021
        %1199 = vmatpush1.msra.mxu0 %v1020
        %1200 = vmatprep.subr.mxu0 %v1028
        %1201 = vmatpush1.msra.mxu0 %v1027
        %1202 = vmatprep.subr.mxu0 0.0
        %1203 = vmatpush1.msra.mxu0 0.0
        %1204 = vmatprep.subr.mxu0 0.0
        %1205 = vmatpush1.msra.mxu0 0.0
        %1206 = vmatprep.subr.mxu0 0.0
        %1207 = vmatpush1.msra.mxu0 0.0
        %1208 = vmatprep.subr.mxu0 0.0
        %1209 = vmatpush1.msra.mxu0 0.0
        %1210 = vmatprep.subr.mxu0 0.0
        %1211 = vmatpush1.msra.mxu0 0.0
        %1212 = vmatprep.subr.mxu0 0.0
        %1213 = vmatpush1.msra.mxu0 0.0
        %1214 = vmatprep.subr.mxu0 0.0
        %1215 = vmatpush1.msra.mxu0 0.0
        %1216 = vmatprep.subr.mxu0 0.0
        %1217 = vmatpush1.msra.mxu0 0.0
        %1218 = vmatprep.subr.mxu0 0.0
        %1219 = vmatpush1.msra.mxu0 0.0
        %1220 = vmatprep.subr.mxu0 0.0
        %1221 = vmatpush1.msra.mxu0 0.0
        %1222 = vmatprep.subr.mxu0 0.0
        %1223 = vmatpush1.msra.mxu0 0.0
        %1224 = vmatprep.subr.mxu0 0.0
        %1225 = vmatpush1.msra.mxu0 0.0
        %1226 = vmatprep.subr.mxu0 0.0
        %1227 = vmatpush1.msra.mxu0 0.0
        %1228 = vmatprep.subr.mxu0 0.0
        %1229 = vmatpush1.msra.mxu0 0.0
        %1230 = vmatprep.subr.mxu0 0.0
        %1231 = vmatpush1.msra.mxu0 0.0
        %1232 = vmatprep.subr.mxu0 0.0
        %1233 = vmatpush1.msra.mxu0 0.0
        %1234 = vmatprep.subr.mxu0 0.0
        %1235 = vmatpush1.msra.mxu0 0.0
        %1236 = vmatprep.subr.mxu0 0.0
        %1237 = vmatpush1.msra.mxu0 0.0
        %1238 = vmatprep.subr.mxu0 0.0
        %1239 = vmatpush1.msra.mxu0 0.0
        %1240 = vmatprep.subr.mxu0 0.0
        %1241 = vmatpush1.msra.mxu0 0.0
        %1242 = vmatprep.subr.mxu0 0.0
        %1243 = vmatpush1.msra.mxu0 0.0
        %1244 = vmatprep.subr.mxu0 0.0
        %1245 = vmatpush1.msra.mxu0 0.0
        %1246 = vmatprep.subr.mxu0 0.0
        %1247 = vmatpush1.msra.mxu0 0.0
        %1248 = vmatprep.subr.mxu0 0.0
        %1249 = vmatpush1.msra.mxu0 0.0
        %1250 = vmatprep.subr.mxu0 0.0
        %1251 = vmatpush1.msra.mxu0 0.0
        %1252 = vmatprep.subr.mxu0 0.0
        %1253 = vmatpush1.msra.mxu0 0.0
        %1254 = vmatprep.mubr.f32.mxu0 0.0
        %1255 = vmatmul.mubr.f32.gmra.mrb[0].mxu0 %v1031
        %v1256 = vpop.f32.mrb[0].mxu0
        %v1257 = vadd.f32 0.0, %v1256
        %v1258 = vpop.f32.mrb[0].mxu0
        %v1259 = vadd.f32 0.0, %v1258
        %1260 = vmatprep.mubr.f32.mxu0 0.0
        %1261 = vmatmul.mubr.f32.gmra.mrb[0].mxu0 %v1034
        %v1262 = vpop.f32.mrb[0].mxu0
        %v1263 = vadd.f32 0.0, %v1262
        %v1264 = vpop.f32.mrb[0].mxu0
        %v1265 = vadd.f32 0.0, %v1264
        %1266 = vdwg.mxu0
        %1267 = vmatprep.subr.mxu0 0.0
        %1268 = vmatpush1.msra.mxu0 %v994
        %1269 = vmatprep.subr.mxu0 0.0
        %1270 = vmatpush1.msra.mxu0 %v1001
        %1271 = vmatprep.subr.mxu0 0.0
        %1272 = vmatpush1.msra.mxu0 %v1008
        %1273 = vmatprep.subr.mxu0 0.0
        %1274 = vmatpush1.msra.mxu0 %v1015
        %1275 = vmatprep.subr.mxu0 0.0
        %1276 = vmatpush1.msra.mxu0 %v1022
        %1277 = vmatprep.subr.mxu0 0.0
        %1278 = vmatpush1.msra.mxu0 %v1029
        %1279 = vmatprep.subr.mxu0 0.0
        %1280 = vmatpush1.msra.mxu0 0.0
        %1281 = vmatprep.subr.mxu0 0.0
        %1282 = vmatpush1.msra.mxu0 0.0
        %1283 = vmatprep.subr.mxu0 0.0
        %1284 = vmatpush1.msra.mxu0 0.0
        %1285 = vmatprep.subr.mxu0 0.0
        %1286 = vmatpush1.msra.mxu0 0.0
        %1287 = vmatprep.subr.mxu0 0.0
        %1288 = vmatpush1.msra.mxu0 0.0
        %1289 = vmatprep.subr.mxu0 0.0
        %1290 = vmatpush1.msra.mxu0 0.0
        %1291 = vmatprep.subr.mxu0 0.0
        %1292 = vmatpush1.msra.mxu0 0.0
        %1293 = vmatprep.subr.mxu0 0.0
        %1294 = vmatpush1.msra.mxu0 0.0
        %1295 = vmatprep.subr.mxu0 0.0
        %1296 = vmatpush1.msra.mxu0 0.0
        %1297 = vmatprep.subr.mxu0 0.0
        %1298 = vmatpush1.msra.mxu0 0.0
        %1299 = vmatprep.subr.mxu0 0.0
        %1300 = vmatpush1.msra.mxu0 0.0
        %1301 = vmatprep.subr.mxu0 0.0
        %1302 = vmatpush1.msra.mxu0 0.0
        %1303 = vmatprep.subr.mxu0 0.0
        %1304 = vmatpush1.msra.mxu0 0.0
        %1305 = vmatprep.subr.mxu0 0.0
        %1306 = vmatpush1.msra.mxu0 0.0
        %1307 = vmatprep.subr.mxu0 0.0
        %1308 = vmatpush1.msra.mxu0 0.0
        %1309 = vmatprep.subr.mxu0 0.0
        %1310 = vmatpush1.msra.mxu0 0.0
        %1311 = vmatprep.subr.mxu0 0.0
        %1312 = vmatpush1.msra.mxu0 0.0
        %1313 = vmatprep.subr.mxu0 0.0
        %1314 = vmatpush1.msra.mxu0 0.0
        %1315 = vmatprep.subr.mxu0 0.0
        %1316 = vmatpush1.msra.mxu0 0.0
        %1317 = vmatprep.subr.mxu0 0.0
        %1318 = vmatpush1.msra.mxu0 0.0
        %1319 = vmatprep.subr.mxu0 0.0
        %1320 = vmatpush1.msra.mxu0 0.0
        %1321 = vmatprep.subr.mxu0 0.0
        %1322 = vmatpush1.msra.mxu0 0.0
        %1323 = vmatprep.subr.mxu0 0.0
        %1324 = vmatpush1.msra.mxu0 0.0
        %1325 = vmatprep.subr.mxu0 0.0
        %1326 = vmatpush1.msra.mxu0 0.0
        %1327 = vmatprep.subr.mxu0 0.0
        %1328 = vmatpush1.msra.mxu0 0.0
        %1329 = vmatprep.subr.mxu0 0.0
        %1330 = vmatpush1.msra.mxu0 0.0
        %1331 = vmatprep.mubr.f32.mxu0 0.0
        %1332 = vmatmul.mubr.f32.gmra.mrb[0].mxu0 %v1031
        %v1333 = vpop.f32.mrb[0].mxu0
        %v1334 = vadd.f32 0.0, %v1333
        %v1335 = vpop.f32.mrb[0].mxu0
        %1336 = vmatprep.mubr.f32.mxu0 0.0
        %1337 = vmatmul.mubr.f32.gmra.mrb[0].mxu0 %v1034
        %v1338 = vpop.f32.mrb[0].mxu0
        %v1339 = vadd.f32 0.0, %v1338
        %v1340 = vpop.f32.mrb[0].mxu0
        %1341 = vdwg.mxu0
        %v1342 = vadd.f32 %v971, %v1103
        %v1343 = vadd.f32 %v972, %v1105
        %v1344 = vadd.f32 %v973, %v1180
        %v1345 = vadd.f32 %v974, %v1182
        %v1346 = vadd.f32 %v975, %v1257
        %v1347 = vadd.f32 %v976, %v1259
        %v1348 = vadd.f32 %v977, %v1334
        %v1349 = vadd.f32 %v978, %v1109
        %v1350 = vadd.f32 %v979, %v1111
        %v1351 = vadd.f32 %v980, %v1186
        %v1352 = vadd.f32 %v981, %v1188
        %v1353 = vadd.f32 %v982, %v1263
        %v1354 = vadd.f32 %v983, %v1265
        %v1355 = vadd.f32 %v984, %v1339
        %1356 = vst [vmem:[%s205] sm:$0xff] %v1342
        %1357 = vst [vmem:[%s205 + $0x8] sm:$0xff] %v1343
        %1358 = vst [vmem:[%s205 + $0x10] sm:$0xff] %v1344
        %1359 = vst [vmem:[%s205 + $0x18] sm:$0xff] %v1345
        %1360 = vst [vmem:[%s205 + $0x20] sm:$0xff] %v1346
        %1361 = vst [vmem:[%s205 + $0x28] sm:$0xff] %v1347
        %1362 = vst [vmem:[%s205 + $0x30] sm:$0xff] %v1348
        %1363 = vst [vmem:[%s205 + $0x38] sm:$0x3f] %v1349
        %1364 = vst [vmem:[%s205 + $0x40] sm:$0x3f] %v1350
        %1365 = vst [vmem:[%s205 + $0x48] sm:$0x3f] %v1351
        %1366 = vst [vmem:[%s205 + $0x50] sm:$0x3f] %v1352
        %1367 = vst [vmem:[%s205 + $0x58] sm:$0x3f] %v1353
        %1368 = vst [vmem:[%s205 + $0x60] sm:$0x3f] %v1354
        %1369 = vst [vmem:[%s205 + $0x68] sm:$0x3f] %v1355
        %p1370 = scmp.lt.s32.totalorder %s18, 1
        %s1371 = scalar_select %p1370, %s18, 1
        %s1372 = smul.addr %s1371, 14
        %s1373 = smul.addr %s1372, 8
        %s1374 = scalar_lea.vmem %s3, %s1373
        // Predicated region
        $region41: #{tpu_custom_call.1} parent=31 // pred_check
          %p1375 = pneg %p104
        $region42: #{tpu_custom_call.1} parent=31 // pred_check_branch
          %1377 = sbr.rel (%p1375) target = $region44
        $region43: #{tpu_custom_call.1} parent=31 // pred_region
          _
        $region44: #{tpu_custom_call.1} parent=31 // pred_fallthru
          _
      $region32: #{tpu_custom_call.1} parent=5 // pred_fallthru
        _
      %p1378 = scmp.le.s32.totalorder 2, %s13
      // Predicated region
      $region45: #{tpu_custom_call.1} parent=5 // pred_check
        %p1379 = pneg %p1378
      $region46: #{tpu_custom_call.1} parent=5 // pred_check_branch
        %1381 = sbr.rel (%p1379) target = $region48
      $region47: #{tpu_custom_call.1} parent=5 // pred_region
        %s1382 = ssub.s32 %s13, 2
        // Predicated region
        $region49: #{tpu_custom_call.1} parent=47 // pred_check
          %p1383 = pneg %p110
        $region50: #{tpu_custom_call.1} parent=47 // pred_check_branch
          %1385 = sbr.rel (%p1383) target = $region52
        $region51: #{tpu_custom_call.1} parent=47 // pred_region
          %p1386 = scmp.lt.s32.totalorder %s19, 1
          %s1387 = scalar_select %p1386, %s19, 1
          %s1388 = smul.addr %s1387, 14
          %s1389 = smul.addr %s1388, 8
          %s1390 = scalar_lea.vmem %s3, %s1389
        $region52: #{tpu_custom_call.1} parent=47 // pred_fallthru
          _
      $region48: #{tpu_custom_call.1} parent=5 // pred_fallthru
        _
    $region6: #{tpu_custom_call.1} parent=1 // loop_footer
      %s17 = sadd.s32 1, %s13
    $region7: #{tpu_custom_call.1} parent=1 // loop_footer_branch
      %12 = sbr.rel target = $region3
    $region8: #{tpu_custom_call.1} parent=1 // loop_exit
      _
    %1391 = vsyncpa [#allocation3], 1
    %s1392 = scalar_lea.sflag [#allocation3], 1
    %1393 = vsyncpa %s1392, 1
    %1394 = vsyncpa [#allocation5], 1

</llo_original>
